<compile_context>
chip_gen: v7x
topology: tpu7x:2x2x1
jax: 0.10.0
libtpu: 0.0.40
codegen_flags: <defaults>
</compile_context>

<pallas_src>
import jax
import jax.numpy as jnp
from jax.experimental import pallas as pl
from jax.experimental.pallas import tpu as pltpu

# CLIP/BLIP normalization constants (processor image_mean / image_std).
MEAN = (0.48145466, 0.4578275, 0.40821073)
STD = (0.26862954, 0.26130258, 0.27577711)


# --------------------------------------------------------------------------- #
# Kernel 1: image normalization  (x - mean) / std  ==  x * inv_std + bias     #
# --------------------------------------------------------------------------- #
def _normalize_kernel(x_ref, scale_ref, bias_ref, o_ref):
    # x_ref: (row_tile, W) lane-dense tile; scale/bias: (row_tile, 1) per-row
    # (i.e. per (n, c, h) row -> per channel) multiplier / offset, broadcast
    # across lanes.  Single fused multiply-add; no divides in the kernel.
    xf = x_ref[...].astype(jnp.float32)
    o_ref[...] = (xf * scale_ref[...] + bias_ref[...]).astype(o_ref.dtype)


def _pick_row_tile(rows, w, itemsize, min_steps=8, target_bytes=2 * 1024 * 1024):
    """Pick a row tile (multiple of 8, dividing `rows`) so the grid has at
    least `min_steps` pipelined steps while each buffer stays ~<= target_bytes.
    Falls back to the full extent when rows is not a multiple of 8."""
    if rows % 8 != 0:
        return rows  # must take the full (untiled) extent
    row_bytes = max(w * itemsize, 1)
    max_rows_by_bytes = max(8, (target_bytes // row_bytes) // 8 * 8)

    best_with_steps = None
    best_under_cap = None
    for t in range(8, rows + 1, 8):
        if rows % t != 0:
            continue
        if t <= max_rows_by_bytes:
            best_under_cap = t
            if rows // t >= min_steps:
                best_with_steps = t  # keep the largest satisfying both
    if best_with_steps is not None:
        return best_with_steps
    if best_under_cap is not None:
        return best_under_cap
    return 8


def image_normalize(x: jax.Array, mean, std) -> jax.Array:
    """(x - mean) / std with per-channel mean/std, x in NCHW layout."""
    N, C, H, W = x.shape
    assert C == len(mean) == len(std)
    rows = N * C * H
    itemsize = jnp.dtype(x.dtype).itemsize

    # Host-side precompute: reciprocal + fused bias (no divides in the kernel).
    # Row r = ((n*C + c)*H + h)  ->  channel c = (r // H) % C.
    mean_a = jnp.asarray(mean, jnp.float32)
    inv_std = 1.0 / jnp.asarray(std, jnp.float32)
    scale_rows = jnp.tile(jnp.repeat(inv_std, H), N).reshape(rows, 1)
    bias_rows = jnp.tile(jnp.repeat(-mean_a * inv_std, H), N).reshape(rows, 1)

    # (N*C*H, W): full (8,128)/(16,128) tiles in the sublane dim, W lane-dense.
    x2 = x.reshape(rows, W)

    row_tile = _pick_row_tile(rows, W, itemsize)
    num_tiles = rows // row_tile  # row_tile divides rows by construction

    # Size VMEM for what we actually need: 2x double-buffered (in + out) tiles
    # plus the tiny scale/bias buffers (padded to 128 lanes) and headroom.
    tile_bytes = row_tile * W * itemsize
    vmem_need = 4 * tile_bytes + 4 * row_tile * 128 * 4 + (1 << 20)
    vmem_limit = int(min(max(vmem_need, 4 << 20), 64 << 20))

    out2 = pl.pallas_call(
        _normalize_kernel,
        out_shape=jax.ShapeDtypeStruct((rows, W), x.dtype),
        grid=(num_tiles,),  # 1-D parallel axis -> megacore sharding on v7x
        in_specs=[
            pl.BlockSpec((row_tile, W), lambda i: (i, 0)),   # x tile
            pl.BlockSpec((row_tile, 1), lambda i: (i, 0)),   # per-row scale
            pl.BlockSpec((row_tile, 1), lambda i: (i, 0)),   # per-row bias
        ],
        out_specs=pl.BlockSpec((row_tile, W), lambda i: (i, 0)),
        compiler_params=pltpu.CompilerParams(
            dimension_semantics=("parallel",),
            vmem_limit_bytes=vmem_limit,
        ),
    )(x2, scale_rows, bias_rows)
    return out2.reshape(N, C, H, W)


# --------------------------------------------------------------------------- #
# Kernel 2: BLIP classification head                                           #
#   image_feat = L2-normalize(cls_embed @ W_proj.T + b)                        #
#   logits     = image_feat @ text_feat.T                                      #
# --------------------------------------------------------------------------- #
def _blip_head_kernel(cls_ref, w_ref, b_ref, txt_ref, o_ref):
    # bf16 MXU inputs (native on v5e/v6e/v7x), f32 accumulation & norm math.
    feat = jnp.dot(cls_ref[...], w_ref[...],
                   preferred_element_type=jnp.float32) + b_ref[...]
    sq = jnp.sum(feat * feat, axis=-1, keepdims=True)
    # rsqrt goes to the (otherwise idle) EUP slot; eps matches F.normalize's
    # 1e-12 clamp on the norm (1e-24 on the squared norm).
    feat = feat * jax.lax.rsqrt(jnp.maximum(sq, 1e-24))
    logits = jnp.dot(feat.astype(jnp.bfloat16), txt_ref[...],
                     preferred_element_type=jnp.float32)
    o_ref[...] = logits.astype(o_ref.dtype)


def blip_head(cls_embed, proj_w, proj_b, text_feat):
    """cls_embed: (B, Dh); proj_w: (Dp, Dh) torch-Linear layout; proj_b: (Dp,);
    text_feat: (num_classes, Dp) (already L2-normalized). Returns (B, num_cls).

    Launch-overhead bound at real BLIP shapes: call once per batch with all
    classes; weights/text are pre-transposed and cast to bf16 in the wrapper
    so the kernel is a pure MXU + EUP path with no in-kernel relayout."""
    B, Dh = cls_embed.shape
    Dp = proj_w.shape[0]
    ncls = text_feat.shape[0]

    cls_bf = cls_embed.astype(jnp.bfloat16)
    w_t = proj_w.T.astype(jnp.bfloat16)          # (Dh, Dp) for x @ W
    b2 = proj_b.reshape(1, Dp).astype(jnp.float32)
    txt_t = text_feat.T.astype(jnp.bfloat16)     # (Dp, ncls) -> plain jnp.dot

    vmem = pl.BlockSpec(memory_space=pltpu.MemorySpace.VMEM)
    return pl.pallas_call(
        _blip_head_kernel,
        out_shape=jax.ShapeDtypeStruct((B, ncls), jnp.float32),
        in_specs=[vmem, vmem, vmem, vmem],
        out_specs=vmem,
    )(cls_bf, w_t, b2, txt_t)


# --------------------------------------------------------------------------- #
if __name__ == "__main__":
    key = jax.random.PRNGKey(0)
    k1, k2, k3, k4, k5 = jax.random.split(key, 5)

    # ---- 1) image normalization (processor step) ----
    x = jax.random.uniform(k1, (2, 3, 16, 16), dtype=jnp.float32)
    out = jax.block_until_ready(image_normalize(x, MEAN, STD))

    mean_b = jnp.asarray(MEAN, jnp.float32).reshape(1, 3, 1, 1)
    std_b = jnp.asarray(STD, jnp.float32).reshape(1, 3, 1, 1)
    ref = (x - mean_b) / std_b
    assert jnp.allclose(out, ref, atol=1e-5, rtol=1e-5), "normalize f32 mismatch"

    # bf16 I/O path (halves HBM bytes for this bandwidth-bound kernel).
    x_bf = x.astype(jnp.bfloat16)
    out_bf = jax.block_until_ready(image_normalize(x_bf, MEAN, STD))
    ref_bf = (x_bf.astype(jnp.float32) - mean_b) / std_b
    assert jnp.allclose(out_bf.astype(jnp.float32), ref_bf, atol=2e-2), \
        "normalize bf16 mismatch"

    # ---- 2) classification head (vision_proj + normalize + logits) ----
    B, Dh, Dp, NCLS = 2, 128, 128, 8
    cls_embed = jax.random.normal(k2, (B, Dh), dtype=jnp.float32)
    proj_w = jax.random.normal(k3, (Dp, Dh), dtype=jnp.float32) / jnp.sqrt(Dh)
    proj_b = jax.random.normal(k4, (Dp,), dtype=jnp.float32) * 0.02
    text_feat = jax.random.normal(k5, (NCLS, Dp), dtype=jnp.float32)
    text_feat = text_feat / jnp.linalg.norm(text_feat, axis=-1, keepdims=True)

    logits = jax.block_until_ready(blip_head(cls_embed, proj_w, proj_b, text_feat))

    feat_ref = cls_embed @ proj_w.T + proj_b
    feat_ref = feat_ref / jnp.maximum(
        jnp.linalg.norm(feat_ref, axis=-1, keepdims=True), 1e-12)
    logits_ref = feat_ref @ text_feat.T
    # bf16 MXU inputs -> slightly looser tolerance than pure f32.
    assert jnp.allclose(logits, logits_ref, atol=2e-2, rtol=2e-2), "head mismatch"

    print("KERNEL_OK")
</pallas_src>

<mosaic_0001>
module attributes {stable_mosaic.version = 11 : i64} {
  func.func @_normalize_kernel(%arg0: i32, %arg1: memref<8x16xf32, #tpu.memory_space<vmem>>, %arg2: memref<8x1xf32, #tpu.memory_space<vmem>>, %arg3: memref<8x1xf32, #tpu.memory_space<vmem>>, %arg4: memref<8x16xf32, #tpu.memory_space<vmem>>) attributes {dimension_semantics = [#tpu.dimension_semantics<parallel>], iteration_bounds = array<i64: 12>, scalar_prefetch = 0 : i64, scratch_operands = 0 : i64, tpu.core_type = #tpu.core_type<tc>, window_params = [{transform_indices = @transform_0, window_bounds = array<i64: 8, 16>}, {transform_indices = @transform_1, window_bounds = array<i64: 8, 1>}, {transform_indices = @transform_2, window_bounds = array<i64: 8, 1>}, {transform_indices = @transform_3, window_bounds = array<i64: 8, 16>}]} {
    %c0 = arith.constant 0 : index
    %c0_0 = arith.constant 0 : index
    %0 = vector.load %arg1[%c0, %c0_0] : memref<8x16xf32, #tpu.memory_space<vmem>>, vector<8x16xf32>
    %c0_1 = arith.constant 0 : index
    %c0_2 = arith.constant 0 : index
    %1 = vector.load %arg2[%c0_1, %c0_2] : memref<8x1xf32, #tpu.memory_space<vmem>>, vector<8x1xf32>
    %2 = vector.broadcast %1 : vector<8x1xf32> to vector<8x16xf32>
    %3 = arith.mulf %0, %2 : vector<8x16xf32>
    %c0_3 = arith.constant 0 : index
    %c0_4 = arith.constant 0 : index
    %4 = vector.load %arg3[%c0_3, %c0_4] : memref<8x1xf32, #tpu.memory_space<vmem>>, vector<8x1xf32>
    %5 = vector.broadcast %4 : vector<8x1xf32> to vector<8x16xf32>
    %6 = arith.addf %3, %5 : vector<8x16xf32>
    %c0_5 = arith.constant 0 : index
    %c0_6 = arith.constant 0 : index
    %7 = vector.load %arg4[%c0_5, %c0_6] : memref<8x16xf32, #tpu.memory_space<vmem>>, vector<8x16xf32>
    tpu.vector_store %arg4[%c0_5, %c0_6], %6 {strides = array<i32>} : memref<8x16xf32, #tpu.memory_space<vmem>>, vector<8x16xf32>,
    return
  }
  func.func @transform_0(%arg0: i32) -> (i32, i32) {
    %c0_i32 = arith.constant 0 : i32
    %c0_i32_0 = arith.constant 0 : i32
    return %arg0, %c0_i32 : i32, i32
  }
  func.func @transform_1(%arg0: i32) -> (i32, i32) {
    %c0_i32 = arith.constant 0 : i32
    %c0_i32_0 = arith.constant 0 : i32
    return %arg0, %c0_i32 : i32, i32
  }
  func.func @transform_2(%arg0: i32) -> (i32, i32) {
    %c0_i32 = arith.constant 0 : i32
    %c0_i32_0 = arith.constant 0 : i32
    return %arg0, %c0_i32 : i32, i32
  }
  func.func @transform_3(%arg0: i32) -> (i32, i32) {
    %c0_i32 = arith.constant 0 : i32
    %c0_i32_0 = arith.constant 0 : i32
    return %arg0, %c0_i32 : i32, i32
  }
}

</mosaic_0001>

<llo_original>
// kernel: tpu_custom_call.1
$region0: #{tpu_custom_call.1}
  #allocation0 [shape = 'u32[]', space=smem, size = 0x4, offset = 0x4, fixed_abs, tag = 'smem constant byte address 0x4 - core index']
  #allocation1 [shape = 'u32[144,128]{1,0:T(1,128)}', space=vmem, size = 0x12000, scoped, tag = 'internal scratch']
  %s0 = inlined_call_operand.vmem [shape: f32[96,16], index: 0, kind: input, shape index: {}]
  %s1 = inlined_call_operand.vmem [shape: f32[96,1], index: 1, kind: input, shape index: {}]
  %s2 = inlined_call_operand.vmem [shape: f32[96,1], index: 2, kind: input, shape index: {}]
  %s3 = inlined_call_operand.vmem [shape: f32[96,16], index: 3, kind: output, shape index: {}]
  %s4 = sld [smem:[#allocation0]]
  $region45: #{tpu_custom_call.1} parent=0
    _
  %s6 = ssub.s32 1, %s4
  %s7 = scalar_select 0, %s6, %s4
  loop: start=0, step=1, limit=14
  $region2: #{tpu_custom_call.1} parent=0 // loop_pre_header
    _
  $region3: #{tpu_custom_call.1} parent=0 // loop_header
    %s9 = sphi 0, %s13
    %p10 = scmp.ge.s32.totalorder %s9, 14
    %s19 = sphi 0, %s21
    %s22 = sphi 0, %s19
    %s23 = sphi 0, %s22
    %s39 = sphi 0, %s23
    %s45 = sphi 0, %s47
    %s48 = sphi 0, %s45
    %s49 = sphi 0, %s48
    %s65 = sphi 0, %s49
    %s71 = sphi 0, %s73
    %s74 = sphi 0, %s71
    %s75 = sphi 0, %s74
    %s91 = sphi 0, %s75
    %s97 = sphi 0, %s99
    %s100 = sphi 0, %s97
    %s101 = sphi 0, %s100
    %s117 = sphi 0, %s101
  $region4: #{tpu_custom_call.1} parent=0 // loop_header_branch
    %12 = sbr.rel (%p10) target = $region8
  $region5: #{tpu_custom_call.1} parent=0 // loop_body
    %s14 = ssub.s32 %s9, 1
    %s15 = ssub.s32 %s9, 2
    %s16 = sadd.s32 %s9, 1
    %s17 = ssub.s32 %s9, %s16
    %p18 = scmp.eq.s32.totalorder %s17, 0
    %s20 = sadd.s32 %s19, 1
    %s21 = scalar_select %p18, %s19, %s20
    %p24 = pneg %p18
    %p25 = scmp.eq.s32.totalorder %s9, 11
    %p26 = por %p24, %p25
    %p27 = scmp.ne.s32.totalorder %s19, %s22
    %p28 = scmp.eq.s32.totalorder %s9, 0
    %p29 = por %p27, %p28
    %p30 = scmp.ne.s32.totalorder %s19, %s22
    %p31 = scmp.eq.s32.totalorder %s14, 11
    %p32 = por %p30, %p31
    %p33 = scmp.ne.s32.totalorder %s22, %s23
    %p34 = scmp.eq.s32.totalorder %s14, 0
    %p35 = por %p33, %p34
    %p36 = scmp.ne.s32.totalorder %s22, %s23
    %p37 = scmp.eq.s32.totalorder %s15, 11
    %p38 = por %p36, %p37
    %p40 = scmp.ne.s32.totalorder %s23, %s39
    %p41 = scmp.eq.s32.totalorder %s15, 0
    %p42 = por %p40, %p41
    %s43 = ssub.s32 %s9, %s16
    %p44 = scmp.eq.s32.totalorder %s43, 0
    %s46 = sadd.s32 %s45, 1
    %s47 = scalar_select %p44, %s45, %s46
    %p50 = pneg %p44
    %p51 = scmp.eq.s32.totalorder %s9, 11
    %p52 = por %p50, %p51
    %p53 = scmp.ne.s32.totalorder %s45, %s48
    %p54 = scmp.eq.s32.totalorder %s9, 0
    %p55 = por %p53, %p54
    %p56 = scmp.ne.s32.totalorder %s45, %s48
    %p57 = scmp.eq.s32.totalorder %s14, 11
    %p58 = por %p56, %p57
    %p59 = scmp.ne.s32.totalorder %s48, %s49
    %p60 = scmp.eq.s32.totalorder %s14, 0
    %p61 = por %p59, %p60
    %p62 = scmp.ne.s32.totalorder %s48, %s49
    %p63 = scmp.eq.s32.totalorder %s15, 11
    %p64 = por %p62, %p63
    %p66 = scmp.ne.s32.totalorder %s49, %s65
    %p67 = scmp.eq.s32.totalorder %s15, 0
    %p68 = por %p66, %p67
    %s69 = ssub.s32 %s9, %s16
    %p70 = scmp.eq.s32.totalorder %s69, 0
    %s72 = sadd.s32 %s71, 1
    %s73 = scalar_select %p70, %s71, %s72
    %p76 = pneg %p70
    %p77 = scmp.eq.s32.totalorder %s9, 11
    %p78 = por %p76, %p77
    %p79 = scmp.ne.s32.totalorder %s71, %s74
    %p80 = scmp.eq.s32.totalorder %s9, 0
    %p81 = por %p79, %p80
    %p82 = scmp.ne.s32.totalorder %s71, %s74
    %p83 = scmp.eq.s32.totalorder %s14, 11
    %p84 = por %p82, %p83
    %p85 = scmp.ne.s32.totalorder %s74, %s75
    %p86 = scmp.eq.s32.totalorder %s14, 0
    %p87 = por %p85, %p86
    %p88 = scmp.ne.s32.totalorder %s74, %s75
    %p89 = scmp.eq.s32.totalorder %s15, 11
    %p90 = por %p88, %p89
    %p92 = scmp.ne.s32.totalorder %s75, %s91
    %p93 = scmp.eq.s32.totalorder %s15, 0
    %p94 = por %p92, %p93
    %s95 = ssub.s32 %s9, %s16
    %p96 = scmp.eq.s32.totalorder %s95, 0
    %s98 = sadd.s32 %s97, 1
    %s99 = scalar_select %p96, %s97, %s98
    %p102 = pneg %p96
    %p103 = scmp.eq.s32.totalorder %s9, 11
    %p104 = por %p102, %p103
    %p105 = scmp.ne.s32.totalorder %s97, %s100
    %p106 = scmp.eq.s32.totalorder %s9, 0
    %p107 = por %p105, %p106
    %p108 = scmp.ne.s32.totalorder %s97, %s100
    %p109 = scmp.eq.s32.totalorder %s14, 11
    %p110 = por %p108, %p109
    %p111 = scmp.ne.s32.totalorder %s100, %s101
    %p112 = scmp.eq.s32.totalorder %s14, 0
    %p113 = por %p111, %p112
    %p114 = scmp.ne.s32.totalorder %s100, %s101
    %p115 = scmp.eq.s32.totalorder %s15, 11
    %p116 = por %p114, %p115
    %p118 = scmp.ne.s32.totalorder %s101, %s117
    %p119 = scmp.eq.s32.totalorder %s15, 0
    %p120 = por %p118, %p119
    %p121 = scmp.le.s32.totalorder 1, %s9
    %p122 = scmp.lt.s32.totalorder %s9, 13
    %p123 = pnand %p121, %p122
    %p124 = pneg %p123
    // Predicated region
    $region9: #{tpu_custom_call.1} parent=5 // pred_check
      _
    $region10: #{tpu_custom_call.1} parent=5 // pred_check_branch
      %126 = sbr.rel (%p123) target = $region12
    $region11: #{tpu_custom_call.1} parent=5 // pred_region
      %s127 = ssub.s32 %s9, 1
    $region12: #{tpu_custom_call.1} parent=5 // pred_fallthru
      _
    %p128 = scmp.lt.s32.totalorder %s9, 12
    // Predicated region
    $region13: #{tpu_custom_call.1} parent=5 // pred_check
      %p129 = pneg %p128
    $region14: #{tpu_custom_call.1} parent=5 // pred_check_branch
      %131 = sbr.rel (%p129) target = $region16
    $region15: #{tpu_custom_call.1} parent=5 // pred_region
      // Predicated region
      $region17: #{tpu_custom_call.1} parent=15 // pred_check
        %p132 = pneg %p29
      $region18: #{tpu_custom_call.1} parent=15 // pred_check_branch
        %134 = sbr.rel (%p132) target = $region20
      $region19: #{tpu_custom_call.1} parent=15 // pred_region
        %p135 = scmp.lt.s32.totalorder %s9, 11
        %s136 = scalar_select %p135, %s9, 11
        %s137 = smul.addr %s136, 8
        %s138 = scalar_lea.vmem %s0, %s137
      $region20: #{tpu_custom_call.1} parent=15 // pred_fallthru
        _
      // Predicated region
      $region21: #{tpu_custom_call.1} parent=15 // pred_check
        %p139 = pneg %p55
      $region22: #{tpu_custom_call.1} parent=15 // pred_check_branch
        %141 = sbr.rel (%p139) target = $region24
      $region23: #{tpu_custom_call.1} parent=15 // pred_region
        %p142 = scmp.lt.s32.totalorder %s9, 11
        %s143 = scalar_select %p142, %s9, 11
        %s144 = smul.addr %s143, 8
        %s145 = scalar_lea.vmem %s1, %s144
      $region24: #{tpu_custom_call.1} parent=15 // pred_fallthru
        _
      // Predicated region
      $region25: #{tpu_custom_call.1} parent=15 // pred_check
        %p146 = pneg %p81
      $region26: #{tpu_custom_call.1} parent=15 // pred_check_branch
        %148 = sbr.rel (%p146) target = $region28
      $region27: #{tpu_custom_call.1} parent=15 // pred_region
        %p149 = scmp.lt.s32.totalorder %s9, 11
        %s150 = scalar_select %p149, %s9, 11
        %s151 = smul.addr %s150, 8
        %s152 = scalar_lea.vmem %s2, %s151
      $region28: #{tpu_custom_call.1} parent=15 // pred_fallthru
        _
    $region16: #{tpu_custom_call.1} parent=5 // pred_fallthru
      _
    %p153 = scmp.le.s32.totalorder 1, %s9
    %p154 = scmp.lt.s32.totalorder %s9, 13
    %p155 = pnand %p153, %p154
    %p156 = pneg %p155
    // Predicated region
    $region29: #{tpu_custom_call.1} parent=5 // pred_check
      _
    $region30: #{tpu_custom_call.1} parent=5 // pred_check_branch
      %158 = sbr.rel (%p155) target = $region32
    $region31: #{tpu_custom_call.1} parent=5 // pred_region
      %s159 = ssub.s32 %s9, 1
      %p160 = scmp.lt.s32.totalorder %s14, 11
      %s161 = scalar_select %p160, %s14, 11
      %s162 = smul.addr %s161, 8
      %s163 = scalar_lea.vmem %s0, %s162
      %p164 = pneg %p35
      %p165 = pneg %p32
      %p166 = scmp.lt.s32.totalorder %s14, 11
      %s167 = scalar_select %p166, %s14, 11
      %s168 = smul.addr %s167, 8
      %s169 = scalar_lea.vmem %s1, %s168
      %p170 = pneg %p61
      %p171 = pneg %p58
      %p172 = scmp.lt.s32.totalorder %s14, 11
      %s173 = scalar_select %p172, %s14, 11
      %s174 = smul.addr %s173, 8
      %s175 = scalar_lea.vmem %s2, %s174
      %p176 = pneg %p87
      %p177 = pneg %p84
      %p178 = pneg %p113
      %p179 = pneg %p110
      %p180 = scmp.lt.s32.totalorder %s14, 11
      %s181 = scalar_select %p180, %s14, 11
      %s182 = smul.addr %s181, 8
      %s183 = scalar_lea.vmem %s3, %s182
      %p184 = scmp.lt.s32.totalorder %s14, 11
      %s185 = scalar_select %p184, %s14, 11
      %s186 = smul.addr %s185, 8
      %s187 = scalar_lea.vmem %s0, %s186
      %p188 = scmp.lt.s32.totalorder %s14, 11
      %s189 = scalar_select %p188, %s14, 11
      %s190 = smul.addr %s189, 8
      %s191 = scalar_lea.vmem %s1, %s190
      %p192 = scmp.lt.s32.totalorder %s14, 11
      %s193 = scalar_select %p192, %s14, 11
      %s194 = smul.addr %s193, 8
      %s195 = scalar_lea.vmem %s2, %s194
      %p196 = scmp.lt.s32.totalorder %s14, 11
      %s197 = scalar_select %p196, %s14, 11
      %s198 = smul.addr %s197, 8
      %s199 = scalar_lea.vmem %s3, %s198
      %v200 = vld [vmem:[%s187] sm:$0xff]
      %v201 = vld [vmem:[%s191] sm:$0xff]
      %203 = vset.pattern.permute.xlu0 0
      %204 = vperm.xlu0 %203, %v201
      %v205 = vpop.permute.xlu0 %204
      %v207 = vmul.f32 %v200, %v205
      %v208 = vld [vmem:[%s195] sm:$0xff]
      %210 = vset.pattern.permute.xlu0 0
      %211 = vperm.xlu0 %210, %v208
      %v212 = vpop.permute.xlu0 %211
      %v214 = vadd.f32 %v207, %v212
      %vm215 = vcmask 130048
      %216 = vst.msk [vmem:[%s199] sm:$0xff] %vm215, %v214
      %p217 = scmp.lt.s32.totalorder %s14, 11
      %s218 = scalar_select %p217, %s14, 11
      %s219 = smul.addr %s218, 8
      %s220 = scalar_lea.vmem %s3, %s219
      // Predicated region
      $region33: #{tpu_custom_call.1} parent=31 // pred_check
        %p221 = pneg %p110
      $region34: #{tpu_custom_call.1} parent=31 // pred_check_branch
        %223 = sbr.rel (%p221) target = $region36
      $region35: #{tpu_custom_call.1} parent=31 // pred_region
        _
      $region36: #{tpu_custom_call.1} parent=31 // pred_fallthru
        _
    $region32: #{tpu_custom_call.1} parent=5 // pred_fallthru
      _
    %p224 = scmp.le.s32.totalorder 2, %s9
    // Predicated region
    $region37: #{tpu_custom_call.1} parent=5 // pred_check
      %p225 = pneg %p224
    $region38: #{tpu_custom_call.1} parent=5 // pred_check_branch
      %227 = sbr.rel (%p225) target = $region40
    $region39: #{tpu_custom_call.1} parent=5 // pred_region
      %s228 = ssub.s32 %s9, 2
      // Predicated region
      $region41: #{tpu_custom_call.1} parent=39 // pred_check
        %p229 = pneg %p116
      $region42: #{tpu_custom_call.1} parent=39 // pred_check_branch
        %231 = sbr.rel (%p229) target = $region44
      $region43: #{tpu_custom_call.1} parent=39 // pred_region
        %p232 = scmp.lt.s32.totalorder %s15, 11
        %s233 = scalar_select %p232, %s15, 11
        %s234 = smul.addr %s233, 8
        %s235 = scalar_lea.vmem %s3, %s234
      $region44: #{tpu_custom_call.1} parent=39 // pred_fallthru
        _
    $region40: #{tpu_custom_call.1} parent=5 // pred_fallthru
      _
  $region6: #{tpu_custom_call.1} parent=0 // loop_footer
    %s13 = sadd.s32 1, %s9
  $region7: #{tpu_custom_call.1} parent=0 // loop_footer_branch
    %8 = sbr.rel target = $region3
  $region8: #{tpu_custom_call.1} parent=0 // loop_exit
    _

</llo_original>
